<compile_context>
chip_gen: v6e
topology: v6e:2x2x1
jax: 0.10.0
libtpu: 0.0.40
codegen_flags: <defaults>
</compile_context>

<pallas_src>
import jax
import jax.numpy as jnp
from jax.experimental import pallas as pl
from jax.experimental.pallas import tpu as pltpu

# Configuration taken from the module defaults / script globals.
N_IN = 28 * 28                      # 784
N_OUT = 10
H_LAYER_WIDTHS = [32, 32, 32, 32, 32, 32]
LAYER_WIDTHS = [N_IN] + H_LAYER_WIDTHS        # widths of the Linear+ReLU stack
# Linear layers: (784->32)+ReLU, (32->32)+ReLU x5, then final (32->10), no bias.

_LANE = 128
_SUBLANE = 8


def _round_up(n, m):
    return ((n + m - 1) // m) * m


def _pick_tiling(b):
    """Pick (batch_tile, grid_steps, vmem_limit_bytes) for this chip / batch.

    The kernel is HBM-bandwidth bound; the dominant VMEM cost per row is the
    double-buffered f32 x block (~7.2 KiB/row) plus in-kernel bf16/f32
    temporaries (<~7 KiB/row worst case), so:
      - v7x (64 MiB physical VMEM):   tb_max = 3072, scoped limit 48 MiB
      - v5e/v6e (128 MiB physical):   tb_max = 6144, scoped limit 96 MiB
    """
    tb_max, vmem_limit = 3072, 48 * 1024 * 1024        # safe on v7x
    try:
        info = pltpu.get_tpu_info()
        if info.vmem_capacity_bytes >= 100 * 1024 * 1024:
            tb_max, vmem_limit = 6144, 96 * 1024 * 1024  # v5e / v6e
    except Exception:
        pass

    n_steps = max(1, pl.cdiv(b, tb_max))
    # Guarantee >=2 grid steps for non-trivial batches so
    # dimension_semantics=("parallel",) can shard the batch axis across both
    # v7x TensorCores (harmless on single-TC v5e/v6e).
    if b >= 2 * _SUBLANE:
        n_steps = max(n_steps, 2)
    tb = max(_SUBLANE, _round_up(pl.cdiv(b, n_steps), _SUBLANE))
    grid_steps = pl.cdiv(b, tb)
    return tb, grid_steps, vmem_limit


def _mlp_kernel(x_ref, *rest):
    """rest = (w0_ref, ..., w6_ref, out_ref).

    One batch tile of the whole MLP.  x arrives as raw f32 and is cast to
    bf16 in VMEM (VPU, free at the HBM roofline); weights are resident bf16;
    every matmul accumulates in f32 on the MXU; ReLU runs in f32 and the
    activation is cast back to bf16 before the next MXU pass; logits are
    stored bf16 (lane-dense 128-wide block -> unmasked vst).
    """
    w_refs = rest[:-1]
    o_ref = rest[-1]

    h = x_ref[...].astype(jnp.bfloat16)                  # [tb, 784] bf16
    for w_ref in w_refs[:-1]:
        acc = jnp.dot(h, w_ref[...], preferred_element_type=jnp.float32)
        h = jnp.maximum(acc, 0.0).astype(jnp.bfloat16)
    logits = jnp.dot(h, w_refs[-1][...],
                     preferred_element_type=jnp.float32)
    o_ref[...] = logits.astype(o_ref.dtype)


def neural_network_forward(x_nchw, weights):
    """Forward pass equivalent to NeuralNetwork.forward.

    x_nchw : [B, C, H, W] float32 (flattened to [B, C*H*W])
    weights: list of arrays with shapes (in_i, out_i), no biases.
    Returns: logits [B, N_OUT] float32.
    """
    b = x_nchw.shape[0]
    x = x_nchw.reshape(b, -1)                            # nn.Flatten(); no copy
    if x.dtype != jnp.float32:
        x = x.astype(jnp.float32)
    d_in = x.shape[1]                                    # 784 (full-width block)

    # Zero-pad the (tiny) weights to lane-aligned shapes and cast to bf16.
    # w0 keeps its true input dim (matches the unpadded x block); hidden /
    # final layers pad both dims to 128.  Zero rows/cols keep the math exact:
    # padded activation lanes stay exactly zero through every Linear+ReLU.
    padded_w = []
    for idx, w in enumerate(weights):
        fi, fo = w.shape
        fi_p = fi if idx == 0 else _round_up(fi, _LANE)
        fo_p = _round_up(fo, _LANE)
        wp = (jnp.zeros((fi_p, fo_p), jnp.float32)
                 .at[:fi, :fo].set(w.astype(jnp.float32))
                 .astype(jnp.bfloat16))
        padded_w.append(wp)

    n_out = weights[-1].shape[1]
    n_out_p = _round_up(n_out, _LANE)                    # 10 -> 128

    tb, grid_steps, vmem_limit = _pick_tiling(b)
    total_rows = grid_steps * tb                         # incl. masked boundary

    # x is tiled over the batch grid (boundary tile handled by Pallas masking,
    # so no batch padding copy); weights use a constant block index + single
    # buffering so they are DMA'd once and stay resident in VMEM.
    in_specs = [pl.BlockSpec((tb, d_in), lambda i: (i, 0))]
    for wp in padded_w:
        in_specs.append(
            pl.BlockSpec(wp.shape, lambda i: (0, 0),
                         pipeline_mode=pl.Buffered(1)))

    weight_bytes = sum(int(wp.size) * 2 for wp in padded_w)
    flops = 2 * int(total_rows) * sum(int(wp.shape[0]) * int(wp.shape[1])
                                      for wp in padded_w)
    bytes_accessed = b * d_in * 4 + weight_bytes + b * n_out_p * 2

    out = pl.pallas_call(
        _mlp_kernel,
        grid=(grid_steps,),
        out_shape=jax.ShapeDtypeStruct((b, n_out_p), jnp.bfloat16),
        in_specs=in_specs,
        out_specs=pl.BlockSpec((tb, n_out_p), lambda i: (i, 0)),
        compiler_params=pltpu.CompilerParams(
            # batch axis is embarrassingly parallel -> megacore on v7x
            dimension_semantics=("parallel",),
            vmem_limit_bytes=vmem_limit,
        ),
        cost_estimate=pl.CostEstimate(
            flops=flops, transcendentals=0, bytes_accessed=bytes_accessed),
    )(x, *padded_w)

    # Tiny slice+cast; fold into the consumer in production if bf16 logits OK.
    return out[:, :n_out].astype(jnp.float32)


def init_weights(key):
    """Deterministic weight init (shapes match the PyTorch module, bias=False).

    Stored as (in_features, out_features) so the kernel does x @ W
    (== x @ W_torch.T).  Scaled by 1/sqrt(fan_in) to keep activations O(1)
    so the bf16-vs-f32 comparison is numerically meaningful.
    """
    widths = LAYER_WIDTHS + [N_OUT]
    weights = []
    for i in range(len(widths) - 1):
        key, sub = jax.random.split(key)
        fan_in, fan_out = widths[i], widths[i + 1]
        w = (jax.random.normal(sub, (fan_in, fan_out), dtype=jnp.float32)
             / jnp.sqrt(jnp.float32(fan_in)))
        weights.append(w)
    return weights


def reference_forward(x_nchw, weights):
    """Pure-JAX reference mirroring the kernel's bf16 storage / f32 accum."""
    b = x_nchw.shape[0]
    h = x_nchw.reshape(b, -1).astype(jnp.bfloat16)
    for w in weights[:-1]:
        acc = jnp.dot(h, w.astype(jnp.bfloat16),
                      preferred_element_type=jnp.float32)
        h = jnp.maximum(acc, 0.0).astype(jnp.bfloat16)
    out = jnp.dot(h, weights[-1].astype(jnp.bfloat16),
                  preferred_element_type=jnp.float32)
    return out.astype(jnp.bfloat16).astype(jnp.float32)


if __name__ == "__main__":
    key = jax.random.PRNGKey(0)
    k_x, k_w = jax.random.split(key)
    weights = init_weights(k_w)

    # Case 1: tiny batch -> single grid step, masked boundary rows (tb=8).
    batch = 2
    x = jax.random.normal(k_x, (batch, 1, 28, 28), dtype=jnp.float32)
    logits = jax.block_until_ready(neural_network_forward(x, weights))
    ref = reference_forward(x, weights)
    assert logits.shape == (batch, N_OUT)
    assert jnp.allclose(logits, ref, atol=2e-2, rtol=2e-2), (
        float(jnp.max(jnp.abs(logits - ref))))

    # Case 2: multi-step grid with a ragged last tile (20 rows -> 2 x tb=16),
    # exercising the megacore-friendly >=2-step path and boundary masking.
    k_x2 = jax.random.fold_in(k_x, 1)
    x2 = jax.random.normal(k_x2, (20, 1, 28, 28), dtype=jnp.float32)
    logits2 = jax.block_until_ready(neural_network_forward(x2, weights))
    ref2 = reference_forward(x2, weights)
    assert logits2.shape == (20, N_OUT)
    assert jnp.allclose(logits2, ref2, atol=2e-2, rtol=2e-2), (
        float(jnp.max(jnp.abs(logits2 - ref2))))

    print("KERNEL_OK")
</pallas_src>

<mosaic_0001>
module attributes {stable_mosaic.version = 11 : i64} {
  func.func @_mlp_kernel(%arg0: i32, %arg1: memref<8x784xf32, #tpu.memory_space<vmem>>, %arg2: memref<784x128xbf16, #tpu.memory_space<vmem>>, %arg3: memref<128x128xbf16, #tpu.memory_space<vmem>>, %arg4: memref<128x128xbf16, #tpu.memory_space<vmem>>, %arg5: memref<128x128xbf16, #tpu.memory_space<vmem>>, %arg6: memref<128x128xbf16, #tpu.memory_space<vmem>>, %arg7: memref<128x128xbf16, #tpu.memory_space<vmem>>, %arg8: memref<128x128xbf16, #tpu.memory_space<vmem>>, %arg9: memref<8x128xbf16, #tpu.memory_space<vmem>>) attributes {dimension_semantics = [#tpu.dimension_semantics<parallel>], iteration_bounds = array<i64: 1>, scalar_prefetch = 0 : i64, scratch_operands = 0 : i64, tpu.core_type = #tpu.core_type<tc>, window_params = [{transform_indices = @transform_0, window_bounds = array<i64: 8, 784>}, {pipeline_mode = #tpu.pipeline_mode<synchronous>, transform_indices = @transform_1, window_bounds = array<i64: 784, 128>}, {pipeline_mode = #tpu.pipeline_mode<synchronous>, transform_indices = @transform_2, window_bounds = array<i64: 128, 128>}, {pipeline_mode = #tpu.pipeline_mode<synchronous>, transform_indices = @transform_3, window_bounds = array<i64: 128, 128>}, {pipeline_mode = #tpu.pipeline_mode<synchronous>, transform_indices = @transform_4, window_bounds = array<i64: 128, 128>}, {pipeline_mode = #tpu.pipeline_mode<synchronous>, transform_indices = @transform_5, window_bounds = array<i64: 128, 128>}, {pipeline_mode = #tpu.pipeline_mode<synchronous>, transform_indices = @transform_6, window_bounds = array<i64: 128, 128>}, {pipeline_mode = #tpu.pipeline_mode<synchronous>, transform_indices = @transform_7, window_bounds = array<i64: 128, 128>}, {transform_indices = @transform_8, window_bounds = array<i64: 8, 128>}]} {
    %c0 = arith.constant 0 : index
    %c0_0 = arith.constant 0 : index
    %0 = vector.load %arg1[%c0, %c0_0] : memref<8x784xf32, #tpu.memory_space<vmem>>, vector<8x784xf32>
    %1 = arith.truncf %0 : vector<8x784xf32> to vector<8x784xbf16>
    %c0_1 = arith.constant 0 : index
    %c0_2 = arith.constant 0 : index
    %2 = vector.load %arg2[%c0_1, %c0_2] : memref<784x128xbf16, #tpu.memory_space<vmem>>, vector<784x128xbf16>
    %cst = arith.constant dense<0.000000e+00> : vector<8x128xf32>
    %3 = tpu.matmul %1, %2, %cst {dimension_numbers = #tpu.dot_dimension_numbers<[1], [0], [0], [1], [0, 0, 1, 1], [], []>} : vector<8x784xbf16>, vector<784x128xbf16>, vector<8x128xf32> -> vector<8x128xf32>
    %cst_3 = arith.constant 0.000000e+00 : f32
    %4 = vector.broadcast %cst_3 : f32 to vector<8x128xf32>
    %5 = arith.maximumf %3, %4 : vector<8x128xf32>
    %6 = arith.truncf %5 : vector<8x128xf32> to vector<8x128xbf16>
    %c0_4 = arith.constant 0 : index
    %c0_5 = arith.constant 0 : index
    %7 = vector.load %arg3[%c0_4, %c0_5] : memref<128x128xbf16, #tpu.memory_space<vmem>>, vector<128x128xbf16>
    %cst_6 = arith.constant dense<0.000000e+00> : vector<8x128xf32>
    %8 = tpu.matmul %6, %7, %cst_6 {dimension_numbers = #tpu.dot_dimension_numbers<[1], [0], [0], [1], [0, 0, 1, 1], [], []>} : vector<8x128xbf16>, vector<128x128xbf16>, vector<8x128xf32> -> vector<8x128xf32>
    %cst_7 = arith.constant 0.000000e+00 : f32
    %9 = vector.broadcast %cst_7 : f32 to vector<8x128xf32>
    %10 = arith.maximumf %8, %9 : vector<8x128xf32>
    %11 = arith.truncf %10 : vector<8x128xf32> to vector<8x128xbf16>
    %c0_8 = arith.constant 0 : index
    %c0_9 = arith.constant 0 : index
    %12 = vector.load %arg4[%c0_8, %c0_9] : memref<128x128xbf16, #tpu.memory_space<vmem>>, vector<128x128xbf16>
    %cst_10 = arith.constant dense<0.000000e+00> : vector<8x128xf32>
    %13 = tpu.matmul %11, %12, %cst_10 {dimension_numbers = #tpu.dot_dimension_numbers<[1], [0], [0], [1], [0, 0, 1, 1], [], []>} : vector<8x128xbf16>, vector<128x128xbf16>, vector<8x128xf32> -> vector<8x128xf32>
    %cst_11 = arith.constant 0.000000e+00 : f32
    %14 = vector.broadcast %cst_11 : f32 to vector<8x128xf32>
    %15 = arith.maximumf %13, %14 : vector<8x128xf32>
    %16 = arith.truncf %15 : vector<8x128xf32> to vector<8x128xbf16>
    %c0_12 = arith.constant 0 : index
    %c0_13 = arith.constant 0 : index
    %17 = vector.load %arg5[%c0_12, %c0_13] : memref<128x128xbf16, #tpu.memory_space<vmem>>, vector<128x128xbf16>
    %cst_14 = arith.constant dense<0.000000e+00> : vector<8x128xf32>
    %18 = tpu.matmul %16, %17, %cst_14 {dimension_numbers = #tpu.dot_dimension_numbers<[1], [0], [0], [1], [0, 0, 1, 1], [], []>} : vector<8x128xbf16>, vector<128x128xbf16>, vector<8x128xf32> -> vector<8x128xf32>
    %cst_15 = arith.constant 0.000000e+00 : f32
    %19 = vector.broadcast %cst_15 : f32 to vector<8x128xf32>
    %20 = arith.maximumf %18, %19 : vector<8x128xf32>
    %21 = arith.truncf %20 : vector<8x128xf32> to vector<8x128xbf16>
    %c0_16 = arith.constant 0 : index
    %c0_17 = arith.constant 0 : index
    %22 = vector.load %arg6[%c0_16, %c0_17] : memref<128x128xbf16, #tpu.memory_space<vmem>>, vector<128x128xbf16>
    %cst_18 = arith.constant dense<0.000000e+00> : vector<8x128xf32>
    %23 = tpu.matmul %21, %22, %cst_18 {dimension_numbers = #tpu.dot_dimension_numbers<[1], [0], [0], [1], [0, 0, 1, 1], [], []>} : vector<8x128xbf16>, vector<128x128xbf16>, vector<8x128xf32> -> vector<8x128xf32>
    %cst_19 = arith.constant 0.000000e+00 : f32
    %24 = vector.broadcast %cst_19 : f32 to vector<8x128xf32>
    %25 = arith.maximumf %23, %24 : vector<8x128xf32>
    %26 = arith.truncf %25 : vector<8x128xf32> to vector<8x128xbf16>
    %c0_20 = arith.constant 0 : index
    %c0_21 = arith.constant 0 : index
    %27 = vector.load %arg7[%c0_20, %c0_21] : memref<128x128xbf16, #tpu.memory_space<vmem>>, vector<128x128xbf16>
    %cst_22 = arith.constant dense<0.000000e+00> : vector<8x128xf32>
    %28 = tpu.matmul %26, %27, %cst_22 {dimension_numbers = #tpu.dot_dimension_numbers<[1], [0], [0], [1], [0, 0, 1, 1], [], []>} : vector<8x128xbf16>, vector<128x128xbf16>, vector<8x128xf32> -> vector<8x128xf32>
    %cst_23 = arith.constant 0.000000e+00 : f32
    %29 = vector.broadcast %cst_23 : f32 to vector<8x128xf32>
    %30 = arith.maximumf %28, %29 : vector<8x128xf32>
    %31 = arith.truncf %30 : vector<8x128xf32> to vector<8x128xbf16>
    %c0_24 = arith.constant 0 : index
    %c0_25 = arith.constant 0 : index
    %32 = vector.load %arg8[%c0_24, %c0_25] : memref<128x128xbf16, #tpu.memory_space<vmem>>, vector<128x128xbf16>
    %cst_26 = arith.constant dense<0.000000e+00> : vector<8x128xf32>
    %33 = tpu.matmul %31, %32, %cst_26 {dimension_numbers = #tpu.dot_dimension_numbers<[1], [0], [0], [1], [0, 0, 1, 1], [], []>} : vector<8x128xbf16>, vector<128x128xbf16>, vector<8x128xf32> -> vector<8x128xf32>
    %34 = arith.truncf %33 : vector<8x128xf32> to vector<8x128xbf16>
    %c0_27 = arith.constant 0 : index
    %c0_28 = arith.constant 0 : index
    %35 = vector.load %arg9[%c0_27, %c0_28] : memref<8x128xbf16, #tpu.memory_space<vmem>>, vector<8x128xbf16>
    tpu.vector_store %arg9[%c0_27, %c0_28], %34 {strides = array<i32>} : memref<8x128xbf16, #tpu.memory_space<vmem>>, vector<8x128xbf16>,
    return
  }
  func.func @transform_0(%arg0: i32) -> (i32, i32) {
    %c0_i32 = arith.constant 0 : i32
    %c0_i32_0 = arith.constant 0 : i32
    return %arg0, %c0_i32 : i32, i32
  }
  func.func @transform_1(%arg0: i32) -> (i32, i32) {
    %c0_i32 = arith.constant 0 : i32
    %c0_i32_0 = arith.constant 0 : i32
    %c0_i32_1 = arith.constant 0 : i32
    return %c0_i32, %c0_i32_0 : i32, i32
  }
  func.func @transform_2(%arg0: i32) -> (i32, i32) {
    %c0_i32 = arith.constant 0 : i32
    %c0_i32_0 = arith.constant 0 : i32
    %c0_i32_1 = arith.constant 0 : i32
    return %c0_i32, %c0_i32_0 : i32, i32
  }
  func.func @transform_3(%arg0: i32) -> (i32, i32) {
    %c0_i32 = arith.constant 0 : i32
    %c0_i32_0 = arith.constant 0 : i32
    %c0_i32_1 = arith.constant 0 : i32
    return %c0_i32, %c0_i32_0 : i32, i32
  }
  func.func @transform_4(%arg0: i32) -> (i32, i32) {
    %c0_i32 = arith.constant 0 : i32
    %c0_i32_0 = arith.constant 0 : i32
    %c0_i32_1 = arith.constant 0 : i32
    return %c0_i32, %c0_i32_0 : i32, i32
  }
  func.func @transform_5(%arg0: i32) -> (i32, i32) {
    %c0_i32 = arith.constant 0 : i32
    %c0_i32_0 = arith.constant 0 : i32
    %c0_i32_1 = arith.constant 0 : i32
    return %c0_i32, %c0_i32_0 : i32, i32
  }
  func.func @transform_6(%arg0: i32) -> (i32, i32) {
    %c0_i32 = arith.constant 0 : i32
    %c0_i32_0 = arith.constant 0 : i32
    %c0_i32_1 = arith.constant 0 : i32
    return %c0_i32, %c0_i32_0 : i32, i32
  }
  func.func @transform_7(%arg0: i32) -> (i32, i32) {
    %c0_i32 = arith.constant 0 : i32
    %c0_i32_0 = arith.constant 0 : i32
    %c0_i32_1 = arith.constant 0 : i32
    return %c0_i32, %c0_i32_0 : i32, i32
  }
  func.func @transform_8(%arg0: i32) -> (i32, i32) {
    %c0_i32 = arith.constant 0 : i32
    %c0_i32_0 = arith.constant 0 : i32
    return %arg0, %c0_i32 : i32, i32
  }
}

</mosaic_0001>

<llo_original>
// kernel: tpu_custom_call.1
$region0: #{tpu_custom_call.1}
  #allocation0 [shape = 'u32[]', space=smem, size = 0x4, offset = 0x4, fixed_abs, tag = 'smem constant byte address 0x4 - core index']
  #allocation1 [shape = 'u32[144,128]{1,0:T(1,128)}', space=vmem, size = 0x12000, scoped, tag = 'internal scratch']
  %s0 = inlined_call_operand.hbm [shape: f32[2,784], index: 0, kind: input, shape index: {}]
  %s1 = inlined_call_operand.hbm [shape: bf16[784,128], index: 1, kind: input, shape index: {}]
  %s2 = inlined_call_operand.hbm [shape: bf16[128,128], index: 2, kind: input, shape index: {}]
  %s3 = inlined_call_operand.hbm [shape: bf16[128,128], index: 3, kind: input, shape index: {}]
  %s4 = inlined_call_operand.hbm [shape: bf16[128,128], index: 4, kind: input, shape index: {}]
  %s5 = inlined_call_operand.hbm [shape: bf16[128,128], index: 5, kind: input, shape index: {}]
  %s6 = inlined_call_operand.hbm [shape: bf16[128,128], index: 6, kind: input, shape index: {}]
  %s7 = inlined_call_operand.hbm [shape: bf16[128,128], index: 7, kind: input, shape index: {}]
  %s8 = inlined_call_operand.hbm [shape: bf16[2,128], index: 8, kind: output, shape index: {}]
  %s9 = sld [smem:[#allocation0]]
  $region74: #{tpu_custom_call.1} parent=0
    _
  %s11 = ssub.s32 1, %s9
  %s12 = scalar_select 0, %s11, %s9
  $region1: #{tpu_custom_call.1} parent=0
    #allocation2 [shape = 'u8[28672]{0}', space=vmem, size = 0x7000, scoped, tag = 'input window, operand 0, single buffered']
    #allocation3 [shape = 's32[1]{0}', space=sflag, size = 0x4, scoped, tag = 'scoped memory for tpu_custom_call.1']
    #allocation4 [shape = 's32[1]{0}', space=sflag, size = 0x4, scoped, tag = 'scoped memory for tpu_custom_call.1']
    #allocation5 [shape = 'u8[200704]{0}', space=vmem, size = 0x31000, scoped, tag = 'input window, operand 1, single buffered']
    #allocation6 [shape = 's32[1]{0}', space=sflag, size = 0x4, scoped, tag = 'scoped memory for tpu_custom_call.1']
    #allocation7 [shape = 'u8[32768]{0}', space=vmem, size = 0x8000, scoped, tag = 'input window, operand 2, single buffered']
    #allocation8 [shape = 'u8[32768]{0}', space=vmem, size = 0x8000, scoped, tag = 'input window, operand 3, single buffered']
    #allocation9 [shape = 's32[1]{0}', space=sflag, size = 0x4, scoped, tag = 'scoped memory for tpu_custom_call.1']
    #allocation10 [shape = 'u8[32768]{0}', space=vmem, size = 0x8000, scoped, tag = 'input window, operand 4, single buffered']
    #allocation11 [shape = 'u8[32768]{0}', space=vmem, size = 0x8000, scoped, tag = 'input window, operand 5, single buffered']
    #allocation12 [shape = 's32[1]{0}', space=sflag, size = 0x4, scoped, tag = 'scoped memory for tpu_custom_call.1']
    #allocation13 [shape = 'u8[32768]{0}', space=vmem, size = 0x8000, scoped, tag = 'input window, operand 6, single buffered']
    #allocation14 [shape = 'u8[32768]{0}', space=vmem, size = 0x8000, scoped, tag = 'input window, operand 7, single buffered']
    #allocation15 [shape = 's32[1]{0}', space=sflag, size = 0x4, scoped, tag = 'scoped memory for tpu_custom_call.1']
    #allocation16 [shape = 'u8[2048]{0}', space=vmem, size = 0x800, scoped, tag = 'output window, operand 0, single buffered']
    %13 = vsyncpa [#allocation3], 0
    %14 = vsyncpa [#allocation6], 0
    %15 = vsyncpa [#allocation9], 0
    %16 = vsyncpa [#allocation12], 0
    %17 = vsyncpa [#allocation15], 0
    %18 = vsyncpa [#allocation4], 0
    // Predicated region
    $region2: #{tpu_custom_call.1} parent=1 // pred_check
      _
    $region3: #{tpu_custom_call.1} parent=1 // pred_check_branch
      %20 = sbr.rel (0) target = $region5
    $region4: #{tpu_custom_call.1} parent=1 // pred_region
      %s22 = ssub.s32 896, 224
      %23 = vsyncadd [#allocation3], %s22
      %s24 = sshll.u32 [#allocation2], 4
      %s25 = int_to_ptr.vmem [resolvable:$true] %s24
      %30 = dma.hbm_to_vmem [thread:$0]  %s0, 224, %s25, [#allocation3], 224, 224, 14
    $region5: #{tpu_custom_call.1} parent=1 // pred_fallthru
      _
    // Predicated region
    $region6: #{tpu_custom_call.1} parent=1 // pred_check
      _
    $region7: #{tpu_custom_call.1} parent=1 // pred_check_branch
      %32 = sbr.rel (0) target = $region9
    $region8: #{tpu_custom_call.1} parent=1 // pred_region
      %s34 = ssub.s32 6272, 6272
      %35 = vsyncadd [#allocation6], %s34
      %s36 = sshll.u32 [#allocation5], 4
      %s37 = int_to_ptr.vmem [resolvable:$true] %s36
      %42 = dma.hbm_to_vmem [thread:$0]  %s1, 6272, %s37, [#allocation6], 64, 64, 4
    $region9: #{tpu_custom_call.1} parent=1 // pred_fallthru
      _
    // Predicated region
    $region10: #{tpu_custom_call.1} parent=1 // pred_check
      _
    $region11: #{tpu_custom_call.1} parent=1 // pred_check_branch
      %44 = sbr.rel (0) target = $region13
    $region12: #{tpu_custom_call.1} parent=1 // pred_region
      %s46 = ssub.s32 1024, 1024
      %47 = vsyncadd [#allocation6], %s46
      %s48 = sshll.u32 [#allocation7], 4
      %s49 = int_to_ptr.vmem [resolvable:$true] %s48
      %54 = dma.hbm_to_vmem [thread:$0]  %s2, 1024, %s49, [#allocation6], 64, 64, 4
    $region13: #{tpu_custom_call.1} parent=1 // pred_fallthru
      _
    // Predicated region
    $region14: #{tpu_custom_call.1} parent=1 // pred_check
      _
    $region15: #{tpu_custom_call.1} parent=1 // pred_check_branch
      %56 = sbr.rel (0) target = $region17
    $region16: #{tpu_custom_call.1} parent=1 // pred_region
      %s58 = ssub.s32 1024, 1024
      %59 = vsyncadd [#allocation9], %s58
      %s60 = sshll.u32 [#allocation8], 4
      %s61 = int_to_ptr.vmem [resolvable:$true] %s60
      %66 = dma.hbm_to_vmem [thread:$0]  %s3, 1024, %s61, [#allocation9], 64, 64, 4
    $region17: #{tpu_custom_call.1} parent=1 // pred_fallthru
      _
    // Predicated region
    $region18: #{tpu_custom_call.1} parent=1 // pred_check
      _
    $region19: #{tpu_custom_call.1} parent=1 // pred_check_branch
      %68 = sbr.rel (0) target = $region21
    $region20: #{tpu_custom_call.1} parent=1 // pred_region
      %s70 = ssub.s32 1024, 1024
      %71 = vsyncadd [#allocation9], %s70
      %s72 = sshll.u32 [#allocation10], 4
      %s73 = int_to_ptr.vmem [resolvable:$true] %s72
      %78 = dma.hbm_to_vmem [thread:$0]  %s4, 1024, %s73, [#allocation9], 64, 64, 4
    $region21: #{tpu_custom_call.1} parent=1 // pred_fallthru
      _
    // Predicated region
    $region22: #{tpu_custom_call.1} parent=1 // pred_check
      _
    $region23: #{tpu_custom_call.1} parent=1 // pred_check_branch
      %80 = sbr.rel (0) target = $region25
    $region24: #{tpu_custom_call.1} parent=1 // pred_region
      %s82 = ssub.s32 1024, 1024
      %83 = vsyncadd [#allocation12], %s82
      %s84 = sshll.u32 [#allocation11], 4
      %s85 = int_to_ptr.vmem [resolvable:$true] %s84
      %90 = dma.hbm_to_vmem [thread:$0]  %s5, 1024, %s85, [#allocation12], 64, 64, 4
    $region25: #{tpu_custom_call.1} parent=1 // pred_fallthru
      _
    // Predicated region
    $region26: #{tpu_custom_call.1} parent=1 // pred_check
      _
    $region27: #{tpu_custom_call.1} parent=1 // pred_check_branch
      %92 = sbr.rel (0) target = $region29
    $region28: #{tpu_custom_call.1} parent=1 // pred_region
      %s94 = ssub.s32 1024, 1024
      %95 = vsyncadd [#allocation12], %s94
      %s96 = sshll.u32 [#allocation13], 4
      %s97 = int_to_ptr.vmem [resolvable:$true] %s96
      %102 = dma.hbm_to_vmem [thread:$0]  %s6, 1024, %s97, [#allocation12], 64, 64, 4
    $region29: #{tpu_custom_call.1} parent=1 // pred_fallthru
      _
    // Predicated region
    $region30: #{tpu_custom_call.1} parent=1 // pred_check
      _
    $region31: #{tpu_custom_call.1} parent=1 // pred_check_branch
      %104 = sbr.rel (0) target = $region33
    $region32: #{tpu_custom_call.1} parent=1 // pred_region
      %s106 = ssub.s32 1024, 1024
      %107 = vsyncadd [#allocation15], %s106
      %s108 = sshll.u32 [#allocation14], 4
      %s109 = int_to_ptr.vmem [resolvable:$true] %s108
      %114 = dma.hbm_to_vmem [thread:$0]  %s7, 1024, %s109, [#allocation15], 64, 64, 4
    $region33: #{tpu_custom_call.1} parent=1 // pred_fallthru
      _
    // Predicated region
    $region34: #{tpu_custom_call.1} parent=1 // pred_check
      _
    $region35: #{tpu_custom_call.1} parent=1 // pred_check_branch
      %116 = sbr.rel (0) target = $region37
    $region36: #{tpu_custom_call.1} parent=1 // pred_region
      %117 = dma.done [#allocation3], 896
    $region37: #{tpu_custom_call.1} parent=1 // pred_fallthru
      _
    // Predicated region
    $region38: #{tpu_custom_call.1} parent=1 // pred_check
      _
    $region39: #{tpu_custom_call.1} parent=1 // pred_check_branch
      %119 = sbr.rel (0) target = $region41
    $region40: #{tpu_custom_call.1} parent=1 // pred_region
      %120 = dma.done [#allocation6], 6272
    $region41: #{tpu_custom_call.1} parent=1 // pred_fallthru
      _
    // Predicated region
    $region42: #{tpu_custom_call.1} parent=1 // pred_check
      _
    $region43: #{tpu_custom_call.1} parent=1 // pred_check_branch
      %122 = sbr.rel (0) target = $region45
    $region44: #{tpu_custom_call.1} parent=1 // pred_region
      %123 = dma.done [#allocation6], 1024
    $region45: #{tpu_custom_call.1} parent=1 // pred_fallthru
      _
    // Predicated region
    $region46: #{tpu_custom_call.1} parent=1 // pred_check
      _
    $region47: #{tpu_custom_call.1} parent=1 // pred_check_branch
      %125 = sbr.rel (0) target = $region49
    $region48: #{tpu_custom_call.1} parent=1 // pred_region
      %126 = dma.done [#allocation9], 1024
    $region49: #{tpu_custom_call.1} parent=1 // pred_fallthru
      _
    // Predicated region
    $region50: #{tpu_custom_call.1} parent=1 // pred_check
      _
    $region51: #{tpu_custom_call.1} parent=1 // pred_check_branch
      %128 = sbr.rel (0) target = $region53
    $region52: #{tpu_custom_call.1} parent=1 // pred_region
      %129 = dma.done [#allocation9], 1024
    $region53: #{tpu_custom_call.1} parent=1 // pred_fallthru
      _
    // Predicated region
    $region54: #{tpu_custom_call.1} parent=1 // pred_check
      _
    $region55: #{tpu_custom_call.1} parent=1 // pred_check_branch
      %131 = sbr.rel (0) target = $region57
    $region56: #{tpu_custom_call.1} parent=1 // pred_region
      %132 = dma.done [#allocation12], 1024
    $region57: #{tpu_custom_call.1} parent=1 // pred_fallthru
      _
    // Predicated region
    $region58: #{tpu_custom_call.1} parent=1 // pred_check
      _
    $region59: #{tpu_custom_call.1} parent=1 // pred_check_branch
      %134 = sbr.rel (0) target = $region61
    $region60: #{tpu_custom_call.1} parent=1 // pred_region
      %135 = dma.done [#allocation12], 1024
    $region61: #{tpu_custom_call.1} parent=1 // pred_fallthru
      _
    // Predicated region
    $region62: #{tpu_custom_call.1} parent=1 // pred_check
      _
    $region63: #{tpu_custom_call.1} parent=1 // pred_check_branch
      %137 = sbr.rel (0) target = $region65
    $region64: #{tpu_custom_call.1} parent=1 // pred_region
      %138 = dma.done [#allocation15], 1024
    $region65: #{tpu_custom_call.1} parent=1 // pred_fallthru
      _
    %v140 = vld [vmem:[#allocation2] sm:$0xff]
    %v141 = vld [vmem:[#allocation2 + $0x8] sm:$0x3f]
    %v142 = vld [vmem:[#allocation2 + $0xe] sm:$0xff]
    %v143 = vld [vmem:[#allocation2 + $0x16] sm:$0x3f]
    %v144 = vld [vmem:[#allocation2 + $0x1c] sm:$0xff]
    %v145 = vld [vmem:[#allocation2 + $0x24] sm:$0x3f]
    %v146 = vld [vmem:[#allocation2 + $0x2a] sm:$0xff]
    %v147 = vld [vmem:[#allocation2 + $0x32] sm:$0x3f]
    %v156 = vcombine.low %v140, %v142
    %v157 = vcombine.high %v140, %v142
    %v158 = vcombine.low %v144, %v146
    %v159 = vcombine.high %v144, %v146
    %v161 = vunpack.c.l.s4 1983009808
    %v162 = vunpack.c.0.s8 %v161
    %v163 = vlaneseq
    %v164 = vshrl.u32 %v163, 7
    %v165 = vsub.s32 %v162, %v164
    %v166 = vrot.slane %v156, %v165
    %v168 = vunpack.c.l.s4 1983009808
    %v169 = vunpack.c.0.s8 %v168
    %v170 = vlaneseq
    %v171 = vshrl.u32 %v170, 7
    %v172 = vsub.s32 %v169, %v171
    %v173 = vrot.slane %v157, %v172
    %v175 = vunpack.c.l.s4 1983009808
    %v176 = vunpack.c.0.s8 %v175
    %v177 = vlaneseq
    %v178 = vshrl.u32 %v177, 7
    %v179 = vsub.s32 %v176, %v178
    %v180 = vrot.slane %v158, %v179
    %v182 = vunpack.c.l.s4 1983009808
    %v183 = vunpack.c.0.s8 %v182
    %v184 = vlaneseq
    %v185 = vshrl.u32 %v184, 7
    %v186 = vsub.s32 %v183, %v185
    %v187 = vrot.slane %v159, %v186
    %v188 = vcombine.low %v166, %v180
    %v189 = vcombine.high %v166, %v180
    %v190 = vcombine.low %v173, %v187
    %v191 = vcombine.high %v173, %v187
    %v192 = vcombine.low %v141, %v143
    %v193 = vcombine.high %v141, %v143
    %v194 = vcombine.low %v145, %v147
    %v195 = vcombine.high %v145, %v147
    %v197 = vunpack.c.l.s4 1983009808
    %v198 = vunpack.c.0.s8 %v197
    %v199 = vlaneseq
    %v200 = vshrl.u32 %v199, 7
    %v201 = vsub.s32 %v198, %v200
    %v202 = vrot.slane %v192, %v201
    %v204 = vunpack.c.l.s4 1983009808
    %v205 = vunpack.c.0.s8 %v204
    %v206 = vlaneseq
    %v207 = vshrl.u32 %v206, 7
    %v208 = vsub.s32 %v205, %v207
    %v209 = vrot.slane %v193, %v208
    %v211 = vunpack.c.l.s4 1983009808
    %v212 = vunpack.c.0.s8 %v211
    %v213 = vlaneseq
    %v214 = vshrl.u32 %v213, 7
    %v215 = vsub.s32 %v212, %v214
    %v216 = vrot.slane %v194, %v215
    %v218 = vunpack.c.l.s4 1983009808
    %v219 = vunpack.c.0.s8 %v218
    %v220 = vlaneseq
    %v221 = vshrl.u32 %v220, 7
    %v222 = vsub.s32 %v219, %v221
    %v223 = vrot.slane %v195, %v222
    %v224 = vcombine.low %v202, %v216
    %v225 = vcombine.high %v202, %v216
    %v226 = vcombine.low %v209, %v223
    %v234 = vpack.c.bf16 %v188, %v188
    %v235 = vpack.c.bf16 %v189, %v189
    %v236 = vpack.c.bf16 %v190, %v190
    %v237 = vpack.c.bf16 %v191, %v191
    %v238 = vpack.c.bf16 %v224, %v224
    %v239 = vpack.c.bf16 %v225, %v225
    %v240 = vpack.c.bf16 %v226, %v226
    %v241 = vld [vmem:[#allocation5] sm:$0xf]
    %v242 = vld [vmem:[#allocation5 + $0x4] sm:$0xf]
    %v243 = vld [vmem:[#allocation5 + $0x8] sm:$0xf]
    %v244 = vld [vmem:[#allocation5 + $0xc] sm:$0xf]
    %v245 = vld [vmem:[#allocation5 + $0x10] sm:$0xf]
    %v246 = vld [vmem:[#allocation5 + $0x14] sm:$0xf]
    %v247 = vld [vmem:[#allocation5 + $0x18] sm:$0xf]
    %v248 = vld [vmem:[#allocation5 + $0x1c] sm:$0xf]
    %v249 = vld [vmem:[#allocation5 + $0x20] sm:$0xf]
    %v250 = vld [vmem:[#allocation5 + $0x24] sm:$0xf]
    %v251 = vld [vmem:[#allocation5 + $0x28] sm:$0xf]
    %v252 = vld [vmem:[#allocation5 + $0x2c] sm:$0xf]
    %v253 = vld [vmem:[#allocation5 + $0x30] sm:$0xf]
    %v254 = vld [vmem:[#allocation5 + $0x34] sm:$0xf]
    %v255 = vld [vmem:[#allocation5 + $0x38] sm:$0xf]
    %v256 = vld [vmem:[#allocation5 + $0x3c] sm:$0xf]
    %v257 = vld [vmem:[#allocation5 + $0x40] sm:$0xf]
    %v258 = vld [vmem:[#allocation5 + $0x44] sm:$0xf]
    %v259 = vld [vmem:[#allocation5 + $0x48] sm:$0xf]
    %v260 = vld [vmem:[#allocation5 + $0x4c] sm:$0xf]
    %v261 = vld [vmem:[#allocation5 + $0x50] sm:$0xf]
    %v262 = vld [vmem:[#allocation5 + $0x54] sm:$0xf]
    %v263 = vld [vmem:[#allocation5 + $0x58] sm:$0xf]
    %v264 = vld [vmem:[#allocation5 + $0x5c] sm:$0xf]
    %v265 = vld [vmem:[#allocation5 + $0x60] sm:$0xf]
    %v266 = vld [vmem:[#allocation5 + $0x64] sm:$0xf]
    %v267 = vld [vmem:[#allocation5 + $0x68] sm:$0xf]
    %v268 = vld [vmem:[#allocation5 + $0x6c] sm:$0xf]
    %v269 = vld [vmem:[#allocation5 + $0x70] sm:$0xf]
    %v270 = vld [vmem:[#allocation5 + $0x74] sm:$0xf]
    %v271 = vld [vmem:[#allocation5 + $0x78] sm:$0xf]
    %v272 = vld [vmem:[#allocation5 + $0x7c] sm:$0xf]
    %v273 = vld [vmem:[#allocation5 + $0x80] sm:$0xf]
    %v274 = vld [vmem:[#allocation5 + $0x84] sm:$0xf]
    %v275 = vld [vmem:[#allocation5 + $0x88] sm:$0xf]
    %v276 = vld [vmem:[#allocation5 + $0x8c] sm:$0xf]
    %v277 = vld [vmem:[#allocation5 + $0x90] sm:$0xf]
    %v278 = vld [vmem:[#allocation5 + $0x94] sm:$0xf]
    %v279 = vld [vmem:[#allocation5 + $0x98] sm:$0xf]
    %v280 = vld [vmem:[#allocation5 + $0x9c] sm:$0xf]
    %v281 = vld [vmem:[#allocation5 + $0xa0] sm:$0xf]
    %v282 = vld [vmem:[#allocation5 + $0xa4] sm:$0xf]
    %v283 = vld [vmem:[#allocation5 + $0xa8] sm:$0xf]
    %v284 = vld [vmem:[#allocation5 + $0xac] sm:$0xf]
    %v285 = vld [vmem:[#allocation5 + $0xb0] sm:$0xf]
    %v286 = vld [vmem:[#allocation5 + $0xb4] sm:$0xf]
    %v287 = vld [vmem:[#allocation5 + $0xb8] sm:$0xf]
    %v288 = vld [vmem:[#allocation5 + $0xbc] sm:$0xf]
    %v289 = vld [vmem:[#allocation5 + $0xc0] sm:$0xf]
    %v290 = vld [vmem:[#allocation5 + $0xc4] sm:$0xf]
    %v291 = vld [vmem:[#allocation5 + $0xc8] sm:$0xf]
    %v292 = vld [vmem:[#allocation5 + $0xcc] sm:$0xf]
    %v293 = vld [vmem:[#allocation5 + $0xd0] sm:$0xf]
    %v294 = vld [vmem:[#allocation5 + $0xd4] sm:$0xf]
    %v295 = vld [vmem:[#allocation5 + $0xd8] sm:$0xf]
    %v296 = vld [vmem:[#allocation5 + $0xdc] sm:$0xf]
    %v297 = vld [vmem:[#allocation5 + $0xe0] sm:$0xf]
    %v298 = vld [vmem:[#allocation5 + $0xe4] sm:$0xf]
    %v299 = vld [vmem:[#allocation5 + $0xe8] sm:$0xf]
    %v300 = vld [vmem:[#allocation5 + $0xec] sm:$0xf]
    %v301 = vld [vmem:[#allocation5 + $0xf0] sm:$0xf]
    %v302 = vld [vmem:[#allocation5 + $0xf4] sm:$0xf]
    %v303 = vld [vmem:[#allocation5 + $0xf8] sm:$0xf]
    %v304 = vld [vmem:[#allocation5 + $0xfc] sm:$0xf]
    %v305 = vld [vmem:[#allocation5 + $0x100] sm:$0xf]
    %v306 = vld [vmem:[#allocation5 + $0x104] sm:$0xf]
    %v307 = vld [vmem:[#allocation5 + $0x108] sm:$0xf]
    %v308 = vld [vmem:[#allocation5 + $0x10c] sm:$0xf]
    %v309 = vld [vmem:[#allocation5 + $0x110] sm:$0xf]
    %v310 = vld [vmem:[#allocation5 + $0x114] sm:$0xf]
    %v311 = vld [vmem:[#allocation5 + $0x118] sm:$0xf]
    %v312 = vld [vmem:[#allocation5 + $0x11c] sm:$0xf]
    %v313 = vld [vmem:[#allocation5 + $0x120] sm:$0xf]
    %v314 = vld [vmem:[#allocation5 + $0x124] sm:$0xf]
    %v315 = vld [vmem:[#allocation5 + $0x128] sm:$0xf]
    %v316 = vld [vmem:[#allocation5 + $0x12c] sm:$0xf]
    %v317 = vld [vmem:[#allocation5 + $0x130] sm:$0xf]
    %v318 = vld [vmem:[#allocation5 + $0x134] sm:$0xf]
    %v319 = vld [vmem:[#allocation5 + $0x138] sm:$0xf]
    %v320 = vld [vmem:[#allocation5 + $0x13c] sm:$0xf]
    %v321 = vld [vmem:[#allocation5 + $0x140] sm:$0xf]
    %v322 = vld [vmem:[#allocation5 + $0x144] sm:$0xf]
    %v323 = vld [vmem:[#allocation5 + $0x148] sm:$0xf]
    %v324 = vld [vmem:[#allocation5 + $0x14c] sm:$0xf]
    %v325 = vld [vmem:[#allocation5 + $0x150] sm:$0xf]
    %v326 = vld [vmem:[#allocation5 + $0x154] sm:$0xf]
    %v327 = vld [vmem:[#allocation5 + $0x158] sm:$0xf]
    %v328 = vld [vmem:[#allocation5 + $0x15c] sm:$0xf]
    %v329 = vld [vmem:[#allocation5 + $0x160] sm:$0xf]
    %v330 = vld [vmem:[#allocation5 + $0x164] sm:$0xf]
    %v331 = vld [vmem:[#allocation5 + $0x168] sm:$0xf]
    %v332 = vld [vmem:[#allocation5 + $0x16c] sm:$0xf]
    %v333 = vld [vmem:[#allocation5 + $0x170] sm:$0xf]
    %v334 = vld [vmem:[#allocation5 + $0x174] sm:$0xf]
    %v335 = vld [vmem:[#allocation5 + $0x178] sm:$0xf]
    %v336 = vld [vmem:[#allocation5 + $0x17c] sm:$0xf]
    %v337 = vld [vmem:[#allocation5 + $0x180] sm:$0xf]
    %v338 = vld [vmem:[#allocation5 + $0x184] sm:$0xf]
    %v437 = vunpack.c.l.b16 %v241
    %v438 = vunpack.c.l.b16 %v242
    %v439 = vunpack.c.l.b16 %v243
    %v440 = vunpack.c.l.b16 %v244
    %v441 = vunpack.c.l.b16 %v245
    %v442 = vunpack.c.l.b16 %v246
    %v443 = vunpack.c.l.b16 %v247
    %v444 = vunpack.c.l.b16 %v248
    %v445 = vunpack.c.l.b16 %v249
    %v446 = vunpack.c.l.b16 %v250
    %v447 = vunpack.c.l.b16 %v251
    %v448 = vunpack.c.l.b16 %v252
    %v449 = vunpack.c.l.b16 %v253
    %v450 = vunpack.c.l.b16 %v254
    %v451 = vunpack.c.l.b16 %v255
    %v452 = vunpack.c.l.b16 %v256
    %v453 = vunpack.c.l.b16 %v257
    %v454 = vunpack.c.l.b16 %v258
    %v455 = vunpack.c.l.b16 %v259
    %v456 = vunpack.c.l.b16 %v260
    %v457 = vunpack.c.l.b16 %v261
    %v458 = vunpack.c.l.b16 %v262
    %v459 = vunpack.c.l.b16 %v263
    %v460 = vunpack.c.l.b16 %v264
    %v461 = vunpack.c.l.b16 %v265
    %v462 = vunpack.c.l.b16 %v266
    %v463 = vunpack.c.l.b16 %v267
    %v464 = vunpack.c.l.b16 %v268
    %v465 = vunpack.c.l.b16 %v269
    %v466 = vunpack.c.l.b16 %v270
    %v467 = vunpack.c.l.b16 %v271
    %v468 = vunpack.c.l.b16 %v272
    %v469 = vunpack.c.l.b16 %v273
    %v470 = vunpack.c.l.b16 %v274
    %v471 = vunpack.c.l.b16 %v275
    %v472 = vunpack.c.l.b16 %v276
    %v473 = vunpack.c.l.b16 %v277
    %v474 = vunpack.c.l.b16 %v278
    %v475 = vunpack.c.l.b16 %v279
    %v476 = vunpack.c.l.b16 %v280
    %v477 = vunpack.c.l.b16 %v281
    %v478 = vunpack.c.l.b16 %v282
    %v479 = vunpack.c.l.b16 %v283
    %v480 = vunpack.c.l.b16 %v284
    %v481 = vunpack.c.l.b16 %v285
    %v482 = vunpack.c.l.b16 %v286
    %v483 = vunpack.c.l.b16 %v287
    %v484 = vunpack.c.l.b16 %v288
    %v485 = vunpack.c.l.b16 %v289
    %v486 = vunpack.c.l.b16 %v290
    %v487 = vunpack.c.l.b16 %v291
    %v488 = vunpack.c.l.b16 %v292
    %v489 = vunpack.c.l.b16 %v293
    %v490 = vunpack.c.l.b16 %v294
    %v491 = vunpack.c.l.b16 %v295
    %v492 = vunpack.c.l.b16 %v296
    %v493 = vunpack.c.l.b16 %v297
    %v494 = vunpack.c.l.b16 %v298
    %v495 = vunpack.c.l.b16 %v299
    %v496 = vunpack.c.l.b16 %v300
    %v497 = vunpack.c.l.b16 %v301
    %v498 = vunpack.c.l.b16 %v302
    %v499 = vunpack.c.l.b16 %v303
    %v500 = vunpack.c.l.b16 %v304
    %v501 = vunpack.c.l.b16 %v305
    %v502 = vunpack.c.l.b16 %v306
    %v503 = vunpack.c.l.b16 %v307
    %v504 = vunpack.c.l.b16 %v308
    %v505 = vunpack.c.l.b16 %v309
    %v506 = vunpack.c.l.b16 %v310
    %v507 = vunpack.c.l.b16 %v311
    %v508 = vunpack.c.l.b16 %v312
    %v509 = vunpack.c.l.b16 %v313
    %v510 = vunpack.c.l.b16 %v314
    %v511 = vunpack.c.l.b16 %v315
    %v512 = vunpack.c.l.b16 %v316
    %v513 = vunpack.c.l.b16 %v317
    %v514 = vunpack.c.l.b16 %v318
    %v515 = vunpack.c.l.b16 %v319
    %v516 = vunpack.c.l.b16 %v320
    %v517 = vunpack.c.l.b16 %v321
    %v518 = vunpack.c.l.b16 %v322
    %v519 = vunpack.c.l.b16 %v323
    %v520 = vunpack.c.l.b16 %v324
    %v521 = vunpack.c.l.b16 %v325
    %v522 = vunpack.c.l.b16 %v326
    %v523 = vunpack.c.l.b16 %v327
    %v524 = vunpack.c.l.b16 %v328
    %v525 = vunpack.c.l.b16 %v329
    %v526 = vunpack.c.l.b16 %v330
    %v527 = vunpack.c.l.b16 %v331
    %v528 = vunpack.c.l.b16 %v332
    %v529 = vunpack.c.l.b16 %v333
    %v530 = vunpack.c.l.b16 %v334
    %v531 = vunpack.c.l.b16 %v335
    %v532 = vunpack.c.l.b16 %v336
    %v533 = vunpack.c.l.b16 %v337
    %v534 = vunpack.c.l.b16 %v338
    %v535 = vpack.c.b16 %v438, %v437
    %v536 = vpack.c.b16 %v440, %v439
    %v537 = vpack.c.b16 %v442, %v441
    %v538 = vpack.c.b16 %v444, %v443
    %v539 = vpack.c.b16 %v446, %v445
    %v540 = vpack.c.b16 %v448, %v447
    %v541 = vpack.c.b16 %v450, %v449
    %v542 = vpack.c.b16 %v452, %v451
    %v543 = vpack.c.b16 %v454, %v453
    %v544 = vpack.c.b16 %v456, %v455
    %v545 = vpack.c.b16 %v458, %v457
    %v546 = vpack.c.b16 %v460, %v459
    %v547 = vpack.c.b16 %v462, %v461
    %v548 = vpack.c.b16 %v464, %v463
    %v549 = vpack.c.b16 %v466, %v465
    %v550 = vpack.c.b16 %v468, %v467
    %v551 = vpack.c.b16 %v470, %v469
    %v552 = vpack.c.b16 %v472, %v471
    %v553 = vpack.c.b16 %v474, %v473
    %v554 = vpack.c.b16 %v476, %v475
    %v555 = vpack.c.b16 %v478, %v477
    %v556 = vpack.c.b16 %v480, %v479
    %v557 = vpack.c.b16 %v482, %v481
    %v558 = vpack.c.b16 %v484, %v483
    %v559 = vpack.c.b16 %v486, %v485
    %v560 = vpack.c.b16 %v488, %v487
    %v561 = vpack.c.b16 %v490, %v489
    %v562 = vpack.c.b16 %v492, %v491
    %v563 = vpack.c.b16 %v494, %v493
    %v564 = vpack.c.b16 %v496, %v495
    %v565 = vpack.c.b16 %v498, %v497
    %v566 = vpack.c.b16 %v500, %v499
    %v567 = vpack.c.b16 %v502, %v501
    %v568 = vpack.c.b16 %v504, %v503
    %v569 = vpack.c.b16 %v506, %v505
    %v570 = vpack.c.b16 %v508, %v507
    %v571 = vpack.c.b16 %v510, %v509
    %v572 = vpack.c.b16 %v512, %v511
    %v573 = vpack.c.b16 %v514, %v513
    %v574 = vpack.c.b16 %v516, %v515
    %v575 = vpack.c.b16 %v518, %v517
    %v576 = vpack.c.b16 %v520, %v519
    %v577 = vpack.c.b16 %v522, %v521
    %v578 = vpack.c.b16 %v524, %v523
    %v579 = vpack.c.b16 %v526, %v525
    %v580 = vpack.c.b16 %v528, %v527
    %v581 = vpack.c.b16 %v530, %v529
    %v582 = vpack.c.b16 %v532, %v531
    %v583 = vpack.c.b16 %v534, %v533
    %vm633 = vcmask 130048
    %v635 = vsel %vm633, %v240, 0
    %637 = vmatprep.subr.bf16.mxu0 0
    %638 = vmatpush1.bf16.msra.mxu0 %v542
    %639 = vmatprep.subr.bf16.mxu0 0
    %640 = vmatpush1.bf16.msra.mxu0 %v541
    %641 = vmatprep.subr.bf16.mxu0 0
    %642 = vmatpush1.bf16.msra.mxu0 %v540
    %643 = vmatprep.subr.bf16.mxu0 0
    %644 = vmatpush1.bf16.msra.mxu0 %v539
    %645 = vmatprep.subr.bf16.mxu0 0
    %646 = vmatpush1.bf16.msra.mxu0 %v538
    %647 = vmatprep.subr.bf16.mxu0 0
    %648 = vmatpush1.bf16.msra.mxu0 %v537
    %649 = vmatprep.subr.bf16.mxu0 0
    %650 = vmatpush1.bf16.msra.mxu0 %v536
    %651 = vmatprep.subr.bf16.mxu0 0
    %652 = vmatpush1.bf16.msra.mxu0 %v535
    %653 = vmatprep.subr.bf16.mxu0 0
    %654 = vmatpush2.bf16.msra.mxu0 %v550
    %655 = vmatprep.subr.bf16.mxu0 0
    %656 = vmatpush2.bf16.msra.mxu0 %v549
    %657 = vmatprep.subr.bf16.mxu0 0
    %658 = vmatpush2.bf16.msra.mxu0 %v548
    %659 = vmatprep.subr.bf16.mxu0 0
    %660 = vmatpush2.bf16.msra.mxu0 %v547
    %661 = vmatprep.subr.bf16.mxu0 0
    %662 = vmatpush2.bf16.msra.mxu0 %v546
    %663 = vmatprep.subr.bf16.mxu0 0
    %664 = vmatpush2.bf16.msra.mxu0 %v545
    %665 = vmatprep.subr.bf16.mxu0 0
    %666 = vmatpush2.bf16.msra.mxu0 %v544
    %667 = vmatprep.subr.bf16.mxu0 0
    %668 = vmatpush2.bf16.msra.mxu0 %v543
    %669 = vmatprep.mubr.bf16.mxu0 %v235
    %670 = vmatmul.mubr.bf16.gmra.mxu0 %v234
    %v671 = vpop.f32.mrf.mxu0
    %v672 = vadd.f32 0.0, %v671
    %v673 = vpop.f32.mrf.mxu0
    %v674 = vpop.f32.mrf.mxu0
    %v675 = vpop.f32.mrf.mxu0
    %676 = vdwg.mxu0
    %677 = vmatprep.subr.bf16.mxu0 0
    %678 = vmatpush1.bf16.msra.mxu0 %v558
    %679 = vmatprep.subr.bf16.mxu0 0
    %680 = vmatpush1.bf16.msra.mxu0 %v557
    %681 = vmatprep.subr.bf16.mxu0 0
    %682 = vmatpush1.bf16.msra.mxu0 %v556
    %683 = vmatprep.subr.bf16.mxu0 0
    %684 = vmatpush1.bf16.msra.mxu0 %v555
    %685 = vmatprep.subr.bf16.mxu0 0
    %686 = vmatpush1.bf16.msra.mxu0 %v554
    %687 = vmatprep.subr.bf16.mxu0 0
    %688 = vmatpush1.bf16.msra.mxu0 %v553
    %689 = vmatprep.subr.bf16.mxu0 0
    %690 = vmatpush1.bf16.msra.mxu0 %v552
    %691 = vmatprep.subr.bf16.mxu0 0
    %692 = vmatpush1.bf16.msra.mxu0 %v551
    %693 = vmatprep.subr.bf16.mxu0 0
    %694 = vmatpush2.bf16.msra.mxu0 %v566
    %695 = vmatprep.subr.bf16.mxu0 0
    %696 = vmatpush2.bf16.msra.mxu0 %v565
    %697 = vmatprep.subr.bf16.mxu0 0
    %698 = vmatpush2.bf16.msra.mxu0 %v564
    %699 = vmatprep.subr.bf16.mxu0 0
    %700 = vmatpush2.bf16.msra.mxu0 %v563
    %701 = vmatprep.subr.bf16.mxu0 0
    %702 = vmatpush2.bf16.msra.mxu0 %v562
    %703 = vmatprep.subr.bf16.mxu0 0
    %704 = vmatpush2.bf16.msra.mxu0 %v561
    %705 = vmatprep.subr.bf16.mxu0 0
    %706 = vmatpush2.bf16.msra.mxu0 %v560
    %707 = vmatprep.subr.bf16.mxu0 0
    %708 = vmatpush2.bf16.msra.mxu0 %v559
    %709 = vmatprep.mubr.bf16.mxu0 %v237
    %710 = vmatmul.mubr.bf16.gmra.mxu0 %v236
    %v711 = vpop.f32.mrf.mxu0
    %v712 = vadd.f32 %v672, %v711
    %v713 = vpop.f32.mrf.mxu0
    %v714 = vpop.f32.mrf.mxu0
    %v715 = vpop.f32.mrf.mxu0
    %716 = vdwg.mxu0
    %717 = vmatprep.subr.bf16.mxu0 0
    %718 = vmatpush1.bf16.msra.mxu0 %v574
    %719 = vmatprep.subr.bf16.mxu0 0
    %720 = vmatpush1.bf16.msra.mxu0 %v573
    %721 = vmatprep.subr.bf16.mxu0 0
    %722 = vmatpush1.bf16.msra.mxu0 %v572
    %723 = vmatprep.subr.bf16.mxu0 0
    %724 = vmatpush1.bf16.msra.mxu0 %v571
    %725 = vmatprep.subr.bf16.mxu0 0
    %726 = vmatpush1.bf16.msra.mxu0 %v570
    %727 = vmatprep.subr.bf16.mxu0 0
    %728 = vmatpush1.bf16.msra.mxu0 %v569
    %729 = vmatprep.subr.bf16.mxu0 0
    %730 = vmatpush1.bf16.msra.mxu0 %v568
    %731 = vmatprep.subr.bf16.mxu0 0
    %732 = vmatpush1.bf16.msra.mxu0 %v567
    %733 = vmatprep.subr.bf16.mxu0 0
    %734 = vmatpush2.bf16.msra.mxu0 %v582
    %735 = vmatprep.subr.bf16.mxu0 0
    %736 = vmatpush2.bf16.msra.mxu0 %v581
    %737 = vmatprep.subr.bf16.mxu0 0
    %738 = vmatpush2.bf16.msra.mxu0 %v580
    %739 = vmatprep.subr.bf16.mxu0 0
    %740 = vmatpush2.bf16.msra.mxu0 %v579
    %741 = vmatprep.subr.bf16.mxu0 0
    %742 = vmatpush2.bf16.msra.mxu0 %v578
    %743 = vmatprep.subr.bf16.mxu0 0
    %744 = vmatpush2.bf16.msra.mxu0 %v577
    %745 = vmatprep.subr.bf16.mxu0 0
    %746 = vmatpush2.bf16.msra.mxu0 %v576
    %747 = vmatprep.subr.bf16.mxu0 0
    %748 = vmatpush2.bf16.msra.mxu0 %v575
    %749 = vmatprep.mubr.bf16.mxu0 %v239
    %750 = vmatmul.mubr.bf16.gmra.mxu0 %v238
    %v751 = vpop.f32.mrf.mxu0
    %v752 = vadd.f32 %v712, %v751
    %v753 = vpop.f32.mrf.mxu0
    %v754 = vpop.f32.mrf.mxu0
    %v755 = vpop.f32.mrf.mxu0
    %756 = vdwg.mxu0
    %757 = vmatprep.subr.bf16.mxu0 0
    %758 = vmatpush1.bf16.msra.mxu0 0
    %759 = vmatprep.subr.bf16.mxu0 0
    %760 = vmatpush1.bf16.msra.mxu0 0
    %761 = vmatprep.subr.bf16.mxu0 0
    %762 = vmatpush1.bf16.msra.mxu0 0
    %763 = vmatprep.subr.bf16.mxu0 0
    %764 = vmatpush1.bf16.msra.mxu0 0
    %765 = vmatprep.subr.bf16.mxu0 0
    %766 = vmatpush1.bf16.msra.mxu0 0
    %767 = vmatprep.subr.bf16.mxu0 0
    %768 = vmatpush1.bf16.msra.mxu0 0
    %769 = vmatprep.subr.bf16.mxu0 0
    %770 = vmatpush1.bf16.msra.mxu0 0
    %771 = vmatprep.subr.bf16.mxu0 0
    %772 = vmatpush1.bf16.msra.mxu0 %v583
    %773 = vmatprep.subr.bf16.mxu0 0
    %774 = vmatpush2.bf16.msra.mxu0 0
    %775 = vmatprep.subr.bf16.mxu0 0
    %776 = vmatpush2.bf16.msra.mxu0 0
    %777 = vmatprep.subr.bf16.mxu0 0
    %778 = vmatpush2.bf16.msra.mxu0 0
    %779 = vmatprep.subr.bf16.mxu0 0
    %780 = vmatpush2.bf16.msra.mxu0 0
    %781 = vmatprep.subr.bf16.mxu0 0
    %782 = vmatpush2.bf16.msra.mxu0 0
    %783 = vmatprep.subr.bf16.mxu0 0
    %784 = vmatpush2.bf16.msra.mxu0 0
    %785 = vmatprep.subr.bf16.mxu0 0
    %786 = vmatpush2.bf16.msra.mxu0 0
    %787 = vmatprep.subr.bf16.mxu0 0
    %788 = vmatpush2.bf16.msra.mxu0 0
    %789 = vmatprep.mubr.bf16.mxu0 0
    %790 = vmatmul.mubr.bf16.gmra.mxu0 %v635
    %v791 = vpop.f32.mrf.mxu0
    %v792 = vadd.f32 %v752, %v791
    %v793 = vpop.f32.mrf.mxu0
    %v794 = vpop.f32.mrf.mxu0
    %v795 = vpop.f32.mrf.mxu0
    %796 = vdwg.mxu0
    %v797 = vmax.f32 %v792, 0.0
    %v798 = vpack.c.bf16 %v797, %v797
    %v799 = vld [vmem:[#allocation7] sm:$0xf]
    %v800 = vld [vmem:[#allocation7 + $0x4] sm:$0xf]
    %v801 = vld [vmem:[#allocation7 + $0x8] sm:$0xf]
    %v802 = vld [vmem:[#allocation7 + $0xc] sm:$0xf]
    %v803 = vld [vmem:[#allocation7 + $0x10] sm:$0xf]
    %v804 = vld [vmem:[#allocation7 + $0x14] sm:$0xf]
    %v805 = vld [vmem:[#allocation7 + $0x18] sm:$0xf]
    %v806 = vld [vmem:[#allocation7 + $0x1c] sm:$0xf]
    %v807 = vld [vmem:[#allocation7 + $0x20] sm:$0xf]
    %v808 = vld [vmem:[#allocation7 + $0x24] sm:$0xf]
    %v809 = vld [vmem:[#allocation7 + $0x28] sm:$0xf]
    %v810 = vld [vmem:[#allocation7 + $0x2c] sm:$0xf]
    %v811 = vld [vmem:[#allocation7 + $0x30] sm:$0xf]
    %v812 = vld [vmem:[#allocation7 + $0x34] sm:$0xf]
    %v813 = vld [vmem:[#allocation7 + $0x38] sm:$0xf]
    %v814 = vld [vmem:[#allocation7 + $0x3c] sm:$0xf]
    %v831 = vunpack.c.l.b16 %v799
    %v832 = vunpack.c.l.b16 %v800
    %v833 = vunpack.c.l.b16 %v801
    %v834 = vunpack.c.l.b16 %v802
    %v835 = vunpack.c.l.b16 %v803
    %v836 = vunpack.c.l.b16 %v804
    %v837 = vunpack.c.l.b16 %v805
    %v838 = vunpack.c.l.b16 %v806
    %v839 = vunpack.c.l.b16 %v807
    %v840 = vunpack.c.l.b16 %v808
    %v841 = vunpack.c.l.b16 %v809
    %v842 = vunpack.c.l.b16 %v810
    %v843 = vunpack.c.l.b16 %v811
    %v844 = vunpack.c.l.b16 %v812
    %v845 = vunpack.c.l.b16 %v813
    %v846 = vunpack.c.l.b16 %v814
    %v847 = vpack.c.b16 %v832, %v831
    %v848 = vpack.c.b16 %v834, %v833
    %v849 = vpack.c.b16 %v836, %v835
    %v850 = vpack.c.b16 %v838, %v837
    %v851 = vpack.c.b16 %v840, %v839
    %v852 = vpack.c.b16 %v842, %v841
    %v853 = vpack.c.b16 %v844, %v843
    %v854 = vpack.c.b16 %v846, %v845
    %863 = vmatprep.subr.bf16.mxu0 0
    %864 = vmatpush1.bf16.msra.mxu0 %v854
    %865 = vmatprep.subr.bf16.mxu0 0
    %866 = vmatpush1.bf16.msra.mxu0 %v853
    %867 = vmatprep.subr.bf16.mxu0 0
    %868 = vmatpush1.bf16.msra.mxu0 %v852
    %869 = vmatprep.subr.bf16.mxu0 0
    %870 = vmatpush1.bf16.msra.mxu0 %v851
    %871 = vmatprep.subr.bf16.mxu0 0
    %872 = vmatpush1.bf16.msra.mxu0 %v850
    %873 = vmatprep.subr.bf16.mxu0 0
    %874 = vmatpush1.bf16.msra.mxu0 %v849
    %875 = vmatprep.subr.bf16.mxu0 0
    %876 = vmatpush1.bf16.msra.mxu0 %v848
    %877 = vmatprep.subr.bf16.mxu0 0
    %878 = vmatpush1.bf16.msra.mxu0 %v847
    %879 = vmatprep.subr.bf16.mxu0 0
    %880 = vmatpush2.bf16.msra.mxu0 0
    %881 = vmatprep.subr.bf16.mxu0 0
    %882 = vmatpush2.bf16.msra.mxu0 0
    %883 = vmatprep.subr.bf16.mxu0 0
    %884 = vmatpush2.bf16.msra.mxu0 0
    %885 = vmatprep.subr.bf16.mxu0 0
    %886 = vmatpush2.bf16.msra.mxu0 0
    %887 = vmatprep.subr.bf16.mxu0 0
    %888 = vmatpush2.bf16.msra.mxu0 0
    %889 = vmatprep.subr.bf16.mxu0 0
    %890 = vmatpush2.bf16.msra.mxu0 0
    %891 = vmatprep.subr.bf16.mxu0 0
    %892 = vmatpush2.bf16.msra.mxu0 0
    %893 = vmatprep.subr.bf16.mxu0 0
    %894 = vmatpush2.bf16.msra.mxu0 0
    %895 = vmatprep.mubr.bf16.mxu0 0
    %896 = vmatmul.mubr.bf16.gmra.mxu0 %v798
    %v897 = vpop.f32.mrf.mxu0
    %v898 = vadd.f32 0.0, %v897
    %v899 = vpop.f32.mrf.mxu0
    %v900 = vpop.f32.mrf.mxu0
    %v901 = vpop.f32.mrf.mxu0
    %902 = vdwg.mxu0
    %v903 = vmax.f32 %v898, 0.0
    %v904 = vpack.c.bf16 %v903, %v903
    %v905 = vld [vmem:[#allocation8] sm:$0xf]
    %v906 = vld [vmem:[#allocation8 + $0x4] sm:$0xf]
    %v907 = vld [vmem:[#allocation8 + $0x8] sm:$0xf]
    %v908 = vld [vmem:[#allocation8 + $0xc] sm:$0xf]
    %v909 = vld [vmem:[#allocation8 + $0x10] sm:$0xf]
    %v910 = vld [vmem:[#allocation8 + $0x14] sm:$0xf]
    %v911 = vld [vmem:[#allocation8 + $0x18] sm:$0xf]
    %v912 = vld [vmem:[#allocation8 + $0x1c] sm:$0xf]
    %v913 = vld [vmem:[#allocation8 + $0x20] sm:$0xf]
    %v914 = vld [vmem:[#allocation8 + $0x24] sm:$0xf]
    %v915 = vld [vmem:[#allocation8 + $0x28] sm:$0xf]
    %v916 = vld [vmem:[#allocation8 + $0x2c] sm:$0xf]
    %v917 = vld [vmem:[#allocation8 + $0x30] sm:$0xf]
    %v918 = vld [vmem:[#allocation8 + $0x34] sm:$0xf]
    %v919 = vld [vmem:[#allocation8 + $0x38] sm:$0xf]
    %v920 = vld [vmem:[#allocation8 + $0x3c] sm:$0xf]
    %v937 = vunpack.c.l.b16 %v905
    %v938 = vunpack.c.l.b16 %v906
    %v939 = vunpack.c.l.b16 %v907
    %v940 = vunpack.c.l.b16 %v908
    %v941 = vunpack.c.l.b16 %v909
    %v942 = vunpack.c.l.b16 %v910
    %v943 = vunpack.c.l.b16 %v911
    %v944 = vunpack.c.l.b16 %v912
    %v945 = vunpack.c.l.b16 %v913
    %v946 = vunpack.c.l.b16 %v914
    %v947 = vunpack.c.l.b16 %v915
    %v948 = vunpack.c.l.b16 %v916
    %v949 = vunpack.c.l.b16 %v917
    %v950 = vunpack.c.l.b16 %v918
    %v951 = vunpack.c.l.b16 %v919
    %v952 = vunpack.c.l.b16 %v920
    %v953 = vpack.c.b16 %v938, %v937
    %v954 = vpack.c.b16 %v940, %v939
    %v955 = vpack.c.b16 %v942, %v941
    %v956 = vpack.c.b16 %v944, %v943
    %v957 = vpack.c.b16 %v946, %v945
    %v958 = vpack.c.b16 %v948, %v947
    %v959 = vpack.c.b16 %v950, %v949
    %v960 = vpack.c.b16 %v952, %v951
    %969 = vmatprep.subr.bf16.mxu0 0
    %970 = vmatpush1.bf16.msra.mxu0 %v960
    %971 = vmatprep.subr.bf16.mxu0 0
    %972 = vmatpush1.bf16.msra.mxu0 %v959
    %973 = vmatprep.subr.bf16.mxu0 0
    %974 = vmatpush1.bf16.msra.mxu0 %v958
    %975 = vmatprep.subr.bf16.mxu0 0
    %976 = vmatpush1.bf16.msra.mxu0 %v957
    %977 = vmatprep.subr.bf16.mxu0 0
    %978 = vmatpush1.bf16.msra.mxu0 %v956
    %979 = vmatprep.subr.bf16.mxu0 0
    %980 = vmatpush1.bf16.msra.mxu0 %v955
    %981 = vmatprep.subr.bf16.mxu0 0
    %982 = vmatpush1.bf16.msra.mxu0 %v954
    %983 = vmatprep.subr.bf16.mxu0 0
    %984 = vmatpush1.bf16.msra.mxu0 %v953
    %985 = vmatprep.subr.bf16.mxu0 0
    %986 = vmatpush2.bf16.msra.mxu0 0
    %987 = vmatprep.subr.bf16.mxu0 0
    %988 = vmatpush2.bf16.msra.mxu0 0
    %989 = vmatprep.subr.bf16.mxu0 0
    %990 = vmatpush2.bf16.msra.mxu0 0
    %991 = vmatprep.subr.bf16.mxu0 0
    %992 = vmatpush2.bf16.msra.mxu0 0
    %993 = vmatprep.subr.bf16.mxu0 0
    %994 = vmatpush2.bf16.msra.mxu0 0
    %995 = vmatprep.subr.bf16.mxu0 0
    %996 = vmatpush2.bf16.msra.mxu0 0
    %997 = vmatprep.subr.bf16.mxu0 0
    %998 = vmatpush2.bf16.msra.mxu0 0
    %999 = vmatprep.subr.bf16.mxu0 0
    %1000 = vmatpush2.bf16.msra.mxu0 0
    %1001 = vmatprep.mubr.bf16.mxu0 0
    %1002 = vmatmul.mubr.bf16.gmra.mxu0 %v904
    %v1003 = vpop.f32.mrf.mxu0
    %v1004 = vadd.f32 0.0, %v1003
    %v1005 = vpop.f32.mrf.mxu0
    %v1006 = vpop.f32.mrf.mxu0
    %v1007 = vpop.f32.mrf.mxu0
    %1008 = vdwg.mxu0
    %v1009 = vmax.f32 %v1004, 0.0
    %v1010 = vpack.c.bf16 %v1009, %v1009
    %v1011 = vld [vmem:[#allocation10] sm:$0xf]
    %v1012 = vld [vmem:[#allocation10 + $0x4] sm:$0xf]
    %v1013 = vld [vmem:[#allocation10 + $0x8] sm:$0xf]
    %v1014 = vld [vmem:[#allocation10 + $0xc] sm:$0xf]
    %v1015 = vld [vmem:[#allocation10 + $0x10] sm:$0xf]
    %v1016 = vld [vmem:[#allocation10 + $0x14] sm:$0xf]
    %v1017 = vld [vmem:[#allocation10 + $0x18] sm:$0xf]
    %v1018 = vld [vmem:[#allocation10 + $0x1c] sm:$0xf]
    %v1019 = vld [vmem:[#allocation10 + $0x20] sm:$0xf]
    %v1020 = vld [vmem:[#allocation10 + $0x24] sm:$0xf]
    %v1021 = vld [vmem:[#allocation10 + $0x28] sm:$0xf]
    %v1022 = vld [vmem:[#allocation10 + $0x2c] sm:$0xf]
    %v1023 = vld [vmem:[#allocation10 + $0x30] sm:$0xf]
    %v1024 = vld [vmem:[#allocation10 + $0x34] sm:$0xf]
    %v1025 = vld [vmem:[#allocation10 + $0x38] sm:$0xf]
    %v1026 = vld [vmem:[#allocation10 + $0x3c] sm:$0xf]
    %v1043 = vunpack.c.l.b16 %v1011
    %v1044 = vunpack.c.l.b16 %v1012
    %v1045 = vunpack.c.l.b16 %v1013
    %v1046 = vunpack.c.l.b16 %v1014
    %v1047 = vunpack.c.l.b16 %v1015
    %v1048 = vunpack.c.l.b16 %v1016
    %v1049 = vunpack.c.l.b16 %v1017
    %v1050 = vunpack.c.l.b16 %v1018
    %v1051 = vunpack.c.l.b16 %v1019
    %v1052 = vunpack.c.l.b16 %v1020
    %v1053 = vunpack.c.l.b16 %v1021
    %v1054 = vunpack.c.l.b16 %v1022
    %v1055 = vunpack.c.l.b16 %v1023
    %v1056 = vunpack.c.l.b16 %v1024
    %v1057 = vunpack.c.l.b16 %v1025
    %v1058 = vunpack.c.l.b16 %v1026
    %v1059 = vpack.c.b16 %v1044, %v1043
    %v1060 = vpack.c.b16 %v1046, %v1045
    %v1061 = vpack.c.b16 %v1048, %v1047
    %v1062 = vpack.c.b16 %v1050, %v1049
    %v1063 = vpack.c.b16 %v1052, %v1051
    %v1064 = vpack.c.b16 %v1054, %v1053
    %v1065 = vpack.c.b16 %v1056, %v1055
    %v1066 = vpack.c.b16 %v1058, %v1057
    %1075 = vmatprep.subr.bf16.mxu0 0
    %1076 = vmatpush1.bf16.msra.mxu0 %v1066
    %1077 = vmatprep.subr.bf16.mxu0 0
    %1078 = vmatpush1.bf16.msra.mxu0 %v1065
    %1079 = vmatprep.subr.bf16.mxu0 0
    %1080 = vmatpush1.bf16.msra.mxu0 %v1064
    %1081 = vmatprep.subr.bf16.mxu0 0
    %1082 = vmatpush1.bf16.msra.mxu0 %v1063
    %1083 = vmatprep.subr.bf16.mxu0 0
    %1084 = vmatpush1.bf16.msra.mxu0 %v1062
    %1085 = vmatprep.subr.bf16.mxu0 0
    %1086 = vmatpush1.bf16.msra.mxu0 %v1061
    %1087 = vmatprep.subr.bf16.mxu0 0
    %1088 = vmatpush1.bf16.msra.mxu0 %v1060
    %1089 = vmatprep.subr.bf16.mxu0 0
    %1090 = vmatpush1.bf16.msra.mxu0 %v1059
    %1091 = vmatprep.subr.bf16.mxu0 0
    %1092 = vmatpush2.bf16.msra.mxu0 0
    %1093 = vmatprep.subr.bf16.mxu0 0
    %1094 = vmatpush2.bf16.msra.mxu0 0
    %1095 = vmatprep.subr.bf16.mxu0 0
    %1096 = vmatpush2.bf16.msra.mxu0 0
    %1097 = vmatprep.subr.bf16.mxu0 0
    %1098 = vmatpush2.bf16.msra.mxu0 0
    %1099 = vmatprep.subr.bf16.mxu0 0
    %1100 = vmatpush2.bf16.msra.mxu0 0
    %1101 = vmatprep.subr.bf16.mxu0 0
    %1102 = vmatpush2.bf16.msra.mxu0 0
    %1103 = vmatprep.subr.bf16.mxu0 0
    %1104 = vmatpush2.bf16.msra.mxu0 0
    %1105 = vmatprep.subr.bf16.mxu0 0
    %1106 = vmatpush2.bf16.msra.mxu0 0
    %1107 = vmatprep.mubr.bf16.mxu0 0
    %1108 = vmatmul.mubr.bf16.gmra.mxu0 %v1010
    %v1109 = vpop.f32.mrf.mxu0
    %v1110 = vadd.f32 0.0, %v1109
    %v1111 = vpop.f32.mrf.mxu0
    %v1112 = vpop.f32.mrf.mxu0
    %v1113 = vpop.f32.mrf.mxu0
    %1114 = vdwg.mxu0
    %v1115 = vmax.f32 %v1110, 0.0
    %v1116 = vpack.c.bf16 %v1115, %v1115
    %v1117 = vld [vmem:[#allocation11] sm:$0xf]
    %v1118 = vld [vmem:[#allocation11 + $0x4] sm:$0xf]
    %v1119 = vld [vmem:[#allocation11 + $0x8] sm:$0xf]
    %v1120 = vld [vmem:[#allocation11 + $0xc] sm:$0xf]
    %v1121 = vld [vmem:[#allocation11 + $0x10] sm:$0xf]
    %v1122 = vld [vmem:[#allocation11 + $0x14] sm:$0xf]
    %v1123 = vld [vmem:[#allocation11 + $0x18] sm:$0xf]
    %v1124 = vld [vmem:[#allocation11 + $0x1c] sm:$0xf]
    %v1125 = vld [vmem:[#allocation11 + $0x20] sm:$0xf]
    %v1126 = vld [vmem:[#allocation11 + $0x24] sm:$0xf]
    %v1127 = vld [vmem:[#allocation11 + $0x28] sm:$0xf]
    %v1128 = vld [vmem:[#allocation11 + $0x2c] sm:$0xf]
    %v1129 = vld [vmem:[#allocation11 + $0x30] sm:$0xf]
    %v1130 = vld [vmem:[#allocation11 + $0x34] sm:$0xf]
    %v1131 = vld [vmem:[#allocation11 + $0x38] sm:$0xf]
    %v1132 = vld [vmem:[#allocation11 + $0x3c] sm:$0xf]
    %v1149 = vunpack.c.l.b16 %v1117
    %v1150 = vunpack.c.l.b16 %v1118
    %v1151 = vunpack.c.l.b16 %v1119
    %v1152 = vunpack.c.l.b16 %v1120
    %v1153 = vunpack.c.l.b16 %v1121
    %v1154 = vunpack.c.l.b16 %v1122
    %v1155 = vunpack.c.l.b16 %v1123
    %v1156 = vunpack.c.l.b16 %v1124
    %v1157 = vunpack.c.l.b16 %v1125
    %v1158 = vunpack.c.l.b16 %v1126
    %v1159 = vunpack.c.l.b16 %v1127
    %v1160 = vunpack.c.l.b16 %v1128
    %v1161 = vunpack.c.l.b16 %v1129
    %v1162 = vunpack.c.l.b16 %v1130
    %v1163 = vunpack.c.l.b16 %v1131
    %v1164 = vunpack.c.l.b16 %v1132
    %v1165 = vpack.c.b16 %v1150, %v1149
    %v1166 = vpack.c.b16 %v1152, %v1151
    %v1167 = vpack.c.b16 %v1154, %v1153
    %v1168 = vpack.c.b16 %v1156, %v1155
    %v1169 = vpack.c.b16 %v1158, %v1157
    %v1170 = vpack.c.b16 %v1160, %v1159
    %v1171 = vpack.c.b16 %v1162, %v1161
    %v1172 = vpack.c.b16 %v1164, %v1163
    %1181 = vmatprep.subr.bf16.mxu0 0
    %1182 = vmatpush1.bf16.msra.mxu0 %v1172
    %1183 = vmatprep.subr.bf16.mxu0 0
    %1184 = vmatpush1.bf16.msra.mxu0 %v1171
    %1185 = vmatprep.subr.bf16.mxu0 0
    %1186 = vmatpush1.bf16.msra.mxu0 %v1170
    %1187 = vmatprep.subr.bf16.mxu0 0
    %1188 = vmatpush1.bf16.msra.mxu0 %v1169
    %1189 = vmatprep.subr.bf16.mxu0 0
    %1190 = vmatpush1.bf16.msra.mxu0 %v1168
    %1191 = vmatprep.subr.bf16.mxu0 0
    %1192 = vmatpush1.bf16.msra.mxu0 %v1167
    %1193 = vmatprep.subr.bf16.mxu0 0
    %1194 = vmatpush1.bf16.msra.mxu0 %v1166
    %1195 = vmatprep.subr.bf16.mxu0 0
    %1196 = vmatpush1.bf16.msra.mxu0 %v1165
    %1197 = vmatprep.subr.bf16.mxu0 0
    %1198 = vmatpush2.bf16.msra.mxu0 0
    %1199 = vmatprep.subr.bf16.mxu0 0
    %1200 = vmatpush2.bf16.msra.mxu0 0
    %1201 = vmatprep.subr.bf16.mxu0 0
    %1202 = vmatpush2.bf16.msra.mxu0 0
    %1203 = vmatprep.subr.bf16.mxu0 0
    %1204 = vmatpush2.bf16.msra.mxu0 0
    %1205 = vmatprep.subr.bf16.mxu0 0
    %1206 = vmatpush2.bf16.msra.mxu0 0
    %1207 = vmatprep.subr.bf16.mxu0 0
    %1208 = vmatpush2.bf16.msra.mxu0 0
    %1209 = vmatprep.subr.bf16.mxu0 0
    %1210 = vmatpush2.bf16.msra.mxu0 0
    %1211 = vmatprep.subr.bf16.mxu0 0
    %1212 = vmatpush2.bf16.msra.mxu0 0
    %1213 = vmatprep.mubr.bf16.mxu0 0
    %1214 = vmatmul.mubr.bf16.gmra.mxu0 %v1116
    %v1215 = vpop.f32.mrf.mxu0
    %v1216 = vadd.f32 0.0, %v1215
    %v1217 = vpop.f32.mrf.mxu0
    %v1218 = vpop.f32.mrf.mxu0
    %v1219 = vpop.f32.mrf.mxu0
    %1220 = vdwg.mxu0
    %v1221 = vmax.f32 %v1216, 0.0
    %v1222 = vpack.c.bf16 %v1221, %v1221
    %v1223 = vld [vmem:[#allocation13] sm:$0xf]
    %v1224 = vld [vmem:[#allocation13 + $0x4] sm:$0xf]
    %v1225 = vld [vmem:[#allocation13 + $0x8] sm:$0xf]
    %v1226 = vld [vmem:[#allocation13 + $0xc] sm:$0xf]
    %v1227 = vld [vmem:[#allocation13 + $0x10] sm:$0xf]
    %v1228 = vld [vmem:[#allocation13 + $0x14] sm:$0xf]
    %v1229 = vld [vmem:[#allocation13 + $0x18] sm:$0xf]
    %v1230 = vld [vmem:[#allocation13 + $0x1c] sm:$0xf]
    %v1231 = vld [vmem:[#allocation13 + $0x20] sm:$0xf]
    %v1232 = vld [vmem:[#allocation13 + $0x24] sm:$0xf]
    %v1233 = vld [vmem:[#allocation13 + $0x28] sm:$0xf]
    %v1234 = vld [vmem:[#allocation13 + $0x2c] sm:$0xf]
    %v1235 = vld [vmem:[#allocation13 + $0x30] sm:$0xf]
    %v1236 = vld [vmem:[#allocation13 + $0x34] sm:$0xf]
    %v1237 = vld [vmem:[#allocation13 + $0x38] sm:$0xf]
    %v1238 = vld [vmem:[#allocation13 + $0x3c] sm:$0xf]
    %v1255 = vunpack.c.l.b16 %v1223
    %v1256 = vunpack.c.l.b16 %v1224
    %v1257 = vunpack.c.l.b16 %v1225
    %v1258 = vunpack.c.l.b16 %v1226
    %v1259 = vunpack.c.l.b16 %v1227
    %v1260 = vunpack.c.l.b16 %v1228
    %v1261 = vunpack.c.l.b16 %v1229
    %v1262 = vunpack.c.l.b16 %v1230
    %v1263 = vunpack.c.l.b16 %v1231
    %v1264 = vunpack.c.l.b16 %v1232
    %v1265 = vunpack.c.l.b16 %v1233
    %v1266 = vunpack.c.l.b16 %v1234
    %v1267 = vunpack.c.l.b16 %v1235
    %v1268 = vunpack.c.l.b16 %v1236
    %v1269 = vunpack.c.l.b16 %v1237
    %v1270 = vunpack.c.l.b16 %v1238
    %v1271 = vpack.c.b16 %v1256, %v1255
    %v1272 = vpack.c.b16 %v1258, %v1257
    %v1273 = vpack.c.b16 %v1260, %v1259
    %v1274 = vpack.c.b16 %v1262, %v1261
    %v1275 = vpack.c.b16 %v1264, %v1263
    %v1276 = vpack.c.b16 %v1266, %v1265
    %v1277 = vpack.c.b16 %v1268, %v1267
    %v1278 = vpack.c.b16 %v1270, %v1269
    %1287 = vmatprep.subr.bf16.mxu0 0
    %1288 = vmatpush1.bf16.msra.mxu0 %v1278
    %1289 = vmatprep.subr.bf16.mxu0 0
    %1290 = vmatpush1.bf16.msra.mxu0 %v1277
    %1291 = vmatprep.subr.bf16.mxu0 0
    %1292 = vmatpush1.bf16.msra.mxu0 %v1276
    %1293 = vmatprep.subr.bf16.mxu0 0
    %1294 = vmatpush1.bf16.msra.mxu0 %v1275
    %1295 = vmatprep.subr.bf16.mxu0 0
    %1296 = vmatpush1.bf16.msra.mxu0 %v1274
    %1297 = vmatprep.subr.bf16.mxu0 0
    %1298 = vmatpush1.bf16.msra.mxu0 %v1273
    %1299 = vmatprep.subr.bf16.mxu0 0
    %1300 = vmatpush1.bf16.msra.mxu0 %v1272
    %1301 = vmatprep.subr.bf16.mxu0 0
    %1302 = vmatpush1.bf16.msra.mxu0 %v1271
    %1303 = vmatprep.subr.bf16.mxu0 0
    %1304 = vmatpush2.bf16.msra.mxu0 0
    %1305 = vmatprep.subr.bf16.mxu0 0
    %1306 = vmatpush2.bf16.msra.mxu0 0
    %1307 = vmatprep.subr.bf16.mxu0 0
    %1308 = vmatpush2.bf16.msra.mxu0 0
    %1309 = vmatprep.subr.bf16.mxu0 0
    %1310 = vmatpush2.bf16.msra.mxu0 0
    %1311 = vmatprep.subr.bf16.mxu0 0
    %1312 = vmatpush2.bf16.msra.mxu0 0
    %1313 = vmatprep.subr.bf16.mxu0 0
    %1314 = vmatpush2.bf16.msra.mxu0 0
    %1315 = vmatprep.subr.bf16.mxu0 0
    %1316 = vmatpush2.bf16.msra.mxu0 0
    %1317 = vmatprep.subr.bf16.mxu0 0
    %1318 = vmatpush2.bf16.msra.mxu0 0
    %1319 = vmatprep.mubr.bf16.mxu0 0
    %1320 = vmatmul.mubr.bf16.gmra.mxu0 %v1222
    %v1321 = vpop.f32.mrf.mxu0
    %v1322 = vadd.f32 0.0, %v1321
    %v1323 = vpop.f32.mrf.mxu0
    %v1324 = vpop.f32.mrf.mxu0
    %v1325 = vpop.f32.mrf.mxu0
    %1326 = vdwg.mxu0
    %v1327 = vmax.f32 %v1322, 0.0
    %v1328 = vpack.c.bf16 %v1327, %v1327
    %v1329 = vld [vmem:[#allocation14] sm:$0xf]
    %v1330 = vld [vmem:[#allocation14 + $0x4] sm:$0xf]
    %v1331 = vld [vmem:[#allocation14 + $0x8] sm:$0xf]
    %v1332 = vld [vmem:[#allocation14 + $0xc] sm:$0xf]
    %v1333 = vld [vmem:[#allocation14 + $0x10] sm:$0xf]
    %v1334 = vld [vmem:[#allocation14 + $0x14] sm:$0xf]
    %v1335 = vld [vmem:[#allocation14 + $0x18] sm:$0xf]
    %v1336 = vld [vmem:[#allocation14 + $0x1c] sm:$0xf]
    %v1337 = vld [vmem:[#allocation14 + $0x20] sm:$0xf]
    %v1338 = vld [vmem:[#allocation14 + $0x24] sm:$0xf]
    %v1339 = vld [vmem:[#allocation14 + $0x28] sm:$0xf]
    %v1340 = vld [vmem:[#allocation14 + $0x2c] sm:$0xf]
    %v1341 = vld [vmem:[#allocation14 + $0x30] sm:$0xf]
    %v1342 = vld [vmem:[#allocation14 + $0x34] sm:$0xf]
    %v1343 = vld [vmem:[#allocation14 + $0x38] sm:$0xf]
    %v1344 = vld [vmem:[#allocation14 + $0x3c] sm:$0xf]
    %v1361 = vunpack.c.l.b16 %v1329
    %v1362 = vunpack.c.l.b16 %v1330
    %v1363 = vunpack.c.l.b16 %v1331
    %v1364 = vunpack.c.l.b16 %v1332
    %v1365 = vunpack.c.l.b16 %v1333
    %v1366 = vunpack.c.l.b16 %v1334
    %v1367 = vunpack.c.l.b16 %v1335
    %v1368 = vunpack.c.l.b16 %v1336
    %v1369 = vunpack.c.l.b16 %v1337
    %v1370 = vunpack.c.l.b16 %v1338
    %v1371 = vunpack.c.l.b16 %v1339
    %v1372 = vunpack.c.l.b16 %v1340
    %v1373 = vunpack.c.l.b16 %v1341
    %v1374 = vunpack.c.l.b16 %v1342
    %v1375 = vunpack.c.l.b16 %v1343
    %v1376 = vunpack.c.l.b16 %v1344
    %v1377 = vpack.c.b16 %v1362, %v1361
    %v1378 = vpack.c.b16 %v1364, %v1363
    %v1379 = vpack.c.b16 %v1366, %v1365
    %v1380 = vpack.c.b16 %v1368, %v1367
    %v1381 = vpack.c.b16 %v1370, %v1369
    %v1382 = vpack.c.b16 %v1372, %v1371
    %v1383 = vpack.c.b16 %v1374, %v1373
    %v1384 = vpack.c.b16 %v1376, %v1375
    %1393 = vmatprep.subr.bf16.mxu0 0
    %1394 = vmatpush1.bf16.msra.mxu0 %v1384
    %1395 = vmatprep.subr.bf16.mxu0 0
    %1396 = vmatpush1.bf16.msra.mxu0 %v1383
    %1397 = vmatprep.subr.bf16.mxu0 0
    %1398 = vmatpush1.bf16.msra.mxu0 %v1382
    %1399 = vmatprep.subr.bf16.mxu0 0
    %1400 = vmatpush1.bf16.msra.mxu0 %v1381
    %1401 = vmatprep.subr.bf16.mxu0 0
    %1402 = vmatpush1.bf16.msra.mxu0 %v1380
    %1403 = vmatprep.subr.bf16.mxu0 0
    %1404 = vmatpush1.bf16.msra.mxu0 %v1379
    %1405 = vmatprep.subr.bf16.mxu0 0
    %1406 = vmatpush1.bf16.msra.mxu0 %v1378
    %1407 = vmatprep.subr.bf16.mxu0 0
    %1408 = vmatpush1.bf16.msra.mxu0 %v1377
    %1409 = vmatprep.subr.bf16.mxu0 0
    %1410 = vmatpush2.bf16.msra.mxu0 0
    %1411 = vmatprep.subr.bf16.mxu0 0
    %1412 = vmatpush2.bf16.msra.mxu0 0
    %1413 = vmatprep.subr.bf16.mxu0 0
    %1414 = vmatpush2.bf16.msra.mxu0 0
    %1415 = vmatprep.subr.bf16.mxu0 0
    %1416 = vmatpush2.bf16.msra.mxu0 0
    %1417 = vmatprep.subr.bf16.mxu0 0
    %1418 = vmatpush2.bf16.msra.mxu0 0
    %1419 = vmatprep.subr.bf16.mxu0 0
    %1420 = vmatpush2.bf16.msra.mxu0 0
    %1421 = vmatprep.subr.bf16.mxu0 0
    %1422 = vmatpush2.bf16.msra.mxu0 0
    %1423 = vmatprep.subr.bf16.mxu0 0
    %1424 = vmatpush2.bf16.msra.mxu0 0
    %1425 = vmatprep.mubr.bf16.mxu0 0
    %1426 = vmatmul.mubr.bf16.gmra.mxu0 %v1328
    %v1427 = vpop.f32.mrf.mxu0
    %v1428 = vadd.f32 0.0, %v1427
    %v1429 = vpop.f32.mrf.mxu0
    %v1430 = vpop.f32.mrf.mxu0
    %v1431 = vpop.f32.mrf.mxu0
    %1432 = vdwg.mxu0
    %v1433 = vpack.c.bf16 %v1428, %v1428
    %v1436 = vunpack.c.l.s4 1966171168
    %v1437 = vunpack.c.0.s8 %v1436
    %v1438 = vlaneseq
    %v1439 = vshrl.u32 %v1438, 7
    %v1440 = vsub.s32 %v1437, %v1439
    %v1441 = vrot.slane %v1433, %v1440
    %v1442 = vcombine.high %v1441, %v1441
    %v1444 = vunpack.c.l.s4 1966171168
    %v1445 = vunpack.c.0.s8 %v1444
    %v1446 = vlaneseq
    %v1447 = vshrl.u32 %v1446, 7
    %v1448 = vsub.s32 %v1445, %v1447
    %v1449 = vrot.slane %v1441, %v1448
    %v1451 = vunpack.c.l.s4 1966171168
    %v1452 = vunpack.c.0.s8 %v1451
    %v1453 = vlaneseq
    %v1454 = vshrl.u32 %v1453, 7
    %v1455 = vsub.s32 %v1452, %v1454
    %v1456 = vrot.slane %v1442, %v1455
    %v1457 = vcombine.high %v1449, %v1449
    %v1458 = vcombine.high %v1456, %v1456
    %1463 = vst [vmem:[#allocation16] sm:$0x1] %v1449
    %1464 = vst [vmem:[#allocation16 + $0x1] sm:$0x1] %v1456
    %1465 = vst [vmem:[#allocation16 + $0x2] sm:$0x1] %v1457
    %1466 = vst [vmem:[#allocation16 + $0x3] sm:$0x1] %v1458
    // Predicated region
    $region66: #{tpu_custom_call.1} parent=1 // pred_check
      _
    $region67: #{tpu_custom_call.1} parent=1 // pred_check_branch
      %1468 = sbr.rel (0) target = $region69
    $region68: #{tpu_custom_call.1} parent=1 // pred_region
      %s1470 = ssub.s32 64, 16
      %1471 = vsyncadd [#allocation4], %s1470
      %s1472 = sshll.u32 [#allocation16], 4
      %s1473 = int_to_ptr.vmem [resolvable:$true] %s1472
      %1478 = dma.vmem_to_hbm [thread:$0]  %s1473, 16, %s8, [#allocation4], 16, 16, 1
    $region69: #{tpu_custom_call.1} parent=1 // pred_fallthru
      _
    // Predicated region
    $region70: #{tpu_custom_call.1} parent=1 // pred_check
      _
    $region71: #{tpu_custom_call.1} parent=1 // pred_check_branch
      %1480 = sbr.rel (0) target = $region73
    $region72: #{tpu_custom_call.1} parent=1 // pred_region
      %1481 = dma.done [#allocation4], 64
    $region73: #{tpu_custom_call.1} parent=1 // pred_fallthru
      _
    %1482 = vsyncpa [#allocation3], 1
    %1483 = vsyncpa [#allocation6], 1
    %1484 = vsyncpa [#allocation9], 1
    %1485 = vsyncpa [#allocation12], 1
    %1486 = vsyncpa [#allocation15], 1
    %1487 = vsyncpa [#allocation4], 1

</llo_original>
